<compile_context>
chip_gen: v7x
topology: tpu7x:2x2x1
jax: 0.10.0
libtpu: 0.0.40
codegen_flags: <defaults>
</compile_context>

<pallas_src>
import functools

import jax
import jax.numpy as jnp
import numpy as np
from jax.experimental import pallas as pl
from jax.experimental.pallas import tpu as pltpu

_LANE = 128
_SUBLANE = 8


def _round_up(v, m):
    return (v + m - 1) // m * m


def _get_activation(name):
    name = name.lower()
    if name == "tanh":
        return jnp.tanh
    if name == "gelu":
        # torch.nn.GELU default is the exact erf formulation.
        return lambda x: jax.nn.gelu(x, approximate=False)
    if name == "silu":
        return jax.nn.silu
    # Mirrors get_fresh_activation(): unknown names (and "relu") fall back to ReLU.
    return lambda x: jnp.maximum(x, 0.0)


# --------------------------------- kernel ------------------------------------

def _make_kernel(num_stages, activation_name):
    act = _get_activation(activation_name)

    def kernel(x_ref, w_ref, b_ref, o_ref):
        # w_ref: (L, Dp, Dp) bf16 packed weights (BN folded, (in, out) layout, zero padded)
        # b_ref: (L, Dp)     f32  packed biases
        def dot(h, li):  # bf16 MXU matmul, f32 accumulation
            return jnp.dot(h.astype(jnp.bfloat16), w_ref[li],
                           preferred_element_type=jnp.float32)

        def bias(li):
            return b_ref[li:li + 1, :]  # (1, Dp), broadcasts over the batch tile

        h = x_ref[...].astype(jnp.float32)                 # (TILE_N, Dp), features on lanes
        for s in range(num_stages):                        # static Python loop (traced once)
            li = 3 * s
            # Linear -> BN (BN scale/shift folded into weight/bias)
            h = dot(h, li) + bias(li)
            # ResidualBlock: linear1 -> bn1 -> act -> linear2 -> bn2 -> +residual -> act
            res = h
            t = act(dot(h, li + 1) + bias(li + 1))
            t = dot(t, li + 2) + bias(li + 2)
            h = act(t + res)
        li = 3 * num_stages
        o_ref[...] = (dot(h, li) + bias(li)).astype(o_ref.dtype)

    return kernel


# --------------------------------- wrapper -----------------------------------

@functools.partial(jax.jit,
                   static_argnames=("num_stages", "activation_name", "out_dim", "tile_n"))
def simple_mlp_residual(x, w_packed, b_packed, *, num_stages, out_dim,
                        activation_name="relu", tile_n=256):
    """x: (N, input_dim) f32.

    w_packed: (L, Dp, Dp) bf16, L = 3*num_stages + 1, BN-folded (in, out) weights, zero padded.
    b_packed: (L, Dp) f32 folded biases, zero padded.
    """
    n, d_in = x.shape
    L, d_pad, _ = w_packed.shape

    tile_n = min(tile_n, _round_up(n, _SUBLANE))
    n_pad = _round_up(n, tile_n)

    # Lane-dense, sublane-aligned activation slab; padded lanes/rows stay exactly zero.
    x_pad = jnp.zeros((n_pad, d_pad), jnp.float32).at[:n, :d_in].set(
        x.astype(jnp.float32))

    out = pl.pallas_call(
        _make_kernel(num_stages, activation_name),
        out_shape=jax.ShapeDtypeStruct((n_pad, d_pad), x.dtype),
        grid=(n_pad // tile_n,),
        in_specs=[
            pl.BlockSpec((tile_n, d_pad), lambda i: (i, 0)),        # streamed batch tile
            pl.BlockSpec((L, d_pad, d_pad), lambda i: (0, 0, 0)),   # weights: VMEM-resident
            pl.BlockSpec((L, d_pad), lambda i: (0, 0)),             # biases:  VMEM-resident
        ],
        out_specs=pl.BlockSpec((tile_n, d_pad), lambda i: (i, 0)),  # lane-dense writeback
        compiler_params=pltpu.CompilerParams(
            dimension_semantics=("parallel",),                      # megacore-shard batch axis
        ),
    )(x_pad, w_packed, b_packed)
    return out[:n, :out_dim]


# ----------------------------- parameter helpers -----------------------------

def _sample_linear(key, d_in, d_out):
    """PyTorch-style Linear init: W (out, in), b (out)."""
    kw, kb = jax.random.split(key)
    bound = 1.0 / np.sqrt(d_in)
    w = jax.random.uniform(kw, (d_out, d_in), jnp.float32, -bound, bound)
    b = jax.random.uniform(kb, (d_out,), jnp.float32, -bound, bound)
    return w, b


def _sample_bn(key, d):
    """Deterministic eval-mode BatchNorm1d params: gamma, beta, running mean/var."""
    kg, kb, km, kv = jax.random.split(key, 4)
    gamma = 1.0 + 0.1 * jax.random.normal(kg, (d,), jnp.float32)
    beta = 0.1 * jax.random.normal(kb, (d,), jnp.float32)
    mean = 0.1 * jax.random.normal(km, (d,), jnp.float32)
    var = jnp.abs(jax.random.normal(kv, (d,), jnp.float32)) + 0.5
    return gamma, beta, mean, var


def _fold_linear_bn(w, b, bn, eps=1e-5):
    """BN(x W^T + b) == x Wf + bf with Wf = W^T * s (per out column), bf = (b - mean)*s + beta."""
    gamma, beta, mean, var = bn
    s = gamma / jnp.sqrt(var + eps)
    return w.T * s[None, :], (b - mean) * s + beta


def pack_params(stages, final, input_dim, output_dim):
    """Fold BN into Linears and pack everything into two contiguous arrays (2 DMAs total)."""
    pairs = []
    for st in stages:
        pairs.append(_fold_linear_bn(st["w_in"], st["b_in"], st["bn_in"]))
        pairs.append(_fold_linear_bn(st["w1"], st["b1"], st["bn1"]))
        pairs.append(_fold_linear_bn(st["w2"], st["b2"], st["bn2"]))
    w_out, b_out = final
    pairs.append((w_out.T, b_out))

    dims = [input_dim, output_dim] + [p[0].shape[1] for p in pairs]
    d_pad = _round_up(max(dims), _LANE)

    L = len(pairs)
    w_packed = np.zeros((L, d_pad, d_pad), np.float32)
    b_packed = np.zeros((L, d_pad), np.float32)
    for i, (w, b) in enumerate(pairs):
        di, do = w.shape
        w_packed[i, :di, :do] = np.asarray(w)
        b_packed[i, :do] = np.asarray(b)
    # bf16 weights: native MXU path, half the weight DMA bytes. Biases stay f32 (VPU math).
    return jnp.asarray(w_packed, jnp.bfloat16), jnp.asarray(b_packed, jnp.float32)


# --------------------------------- reference ----------------------------------

def _reference(x, stages, final, activation_name, eps=1e-5):
    """Plain-JAX eval-mode forward with UNfolded f32 params (mirrors the PyTorch module)."""
    act = _get_activation(activation_name)

    def lin(h, w, b):
        return jnp.dot(h, w.T, precision=jax.lax.Precision.HIGHEST) + b

    def bn(h, p):
        gamma, beta, mean, var = p
        return (h - mean) / jnp.sqrt(var + eps) * gamma + beta

    h = x
    for st in stages:
        h = bn(lin(h, st["w_in"], st["b_in"]), st["bn_in"])
        r = h
        t = act(bn(lin(h, st["w1"], st["b1"]), st["bn1"]))
        t = bn(lin(t, st["w2"], st["b2"]), st["bn2"])
        h = act(t + r)
    w_out, b_out = final
    return lin(h, w_out, b_out)


# ------------------------------------ main -------------------------------------

if __name__ == "__main__":
    # Small shapes consistent with the module.
    N = 8
    input_dim = 16
    layer_size = [32, 64]
    output_dim = 8
    activation_name = "relu"   # get_fresh_activation default

    key = jax.random.PRNGKey(0)
    key, kx = jax.random.split(key)
    x = jax.random.normal(kx, (N, input_dim), dtype=jnp.float32)

    # Build PyTorch-style raw parameters.
    stages = []
    d_prev = input_dim
    for hidden in layer_size:
        key, k0, k1, k2, k3, k4, k5 = jax.random.split(key, 7)
        w_in, b_in = _sample_linear(k0, d_prev, hidden)
        bn_in = _sample_bn(k1, hidden)
        w1, b1 = _sample_linear(k2, hidden, hidden)
        bn1 = _sample_bn(k3, hidden)
        w2, b2 = _sample_linear(k4, hidden, hidden)
        bn2 = _sample_bn(k5, hidden)
        stages.append(dict(w_in=w_in, b_in=b_in, bn_in=bn_in,
                           w1=w1, b1=b1, bn1=bn1,
                           w2=w2, b2=b2, bn2=bn2))
        d_prev = hidden
    key, kf = jax.random.split(key)
    w_out, b_out = _sample_linear(kf, d_prev, output_dim)

    # Fold + pack (wrapper-side, one-time cost).
    w_packed, b_packed = pack_params(stages, (w_out, b_out), input_dim, output_dim)

    out = simple_mlp_residual(x, w_packed, b_packed,
                              num_stages=len(layer_size),
                              out_dim=output_dim,
                              activation_name=activation_name)
    out = jax.block_until_ready(out)

    ref = _reference(x, stages, (w_out, b_out), activation_name)
    # Tolerance accounts for bf16 MXU operands (f32 accumulation) vs. the f32 reference,
    # plus BN-folding reassociation.
    np.testing.assert_allclose(np.asarray(out), np.asarray(ref), rtol=5e-2, atol=5e-2)

    print("KERNEL_OK")
</pallas_src>

<mosaic_0001>
module attributes {stable_mosaic.version = 11 : i64} {
  func.func @kernel(%arg0: i32, %arg1: memref<8x128xf32, #tpu.memory_space<vmem>>, %arg2: memref<7x128x128xbf16, #tpu.memory_space<vmem>>, %arg3: memref<7x128xf32, #tpu.memory_space<vmem>>, %arg4: memref<8x128xf32, #tpu.memory_space<vmem>>) attributes {dimension_semantics = [#tpu.dimension_semantics<parallel>], iteration_bounds = array<i64: 1>, scalar_prefetch = 0 : i64, scratch_operands = 0 : i64, tpu.core_type = #tpu.core_type<tc>, window_params = [{transform_indices = @transform_0, window_bounds = array<i64: 8, 128>}, {pipeline_mode = #tpu.pipeline_mode<synchronous>, transform_indices = @transform_1, window_bounds = array<i64: 7, 128, 128>}, {pipeline_mode = #tpu.pipeline_mode<synchronous>, transform_indices = @transform_2, window_bounds = array<i64: 7, 128>}, {transform_indices = @transform_3, window_bounds = array<i64: 8, 128>}]} {
    %c0 = arith.constant 0 : index
    %c0_0 = arith.constant 0 : index
    %0 = vector.load %arg1[%c0, %c0_0] : memref<8x128xf32, #tpu.memory_space<vmem>>, vector<8x128xf32>
    %1 = arith.truncf %0 : vector<8x128xf32> to vector<8x128xbf16>
    %c0_1 = arith.constant 0 : index
    %c0_2 = arith.constant 0 : index
    %c0_3 = arith.constant 0 : index
    %2 = vector.load %arg2[%c0_1, %c0_2, %c0_3] : memref<7x128x128xbf16, #tpu.memory_space<vmem>>, vector<1x128x128xbf16>
    %3 = vector.shape_cast %2 : vector<1x128x128xbf16> to vector<128x128xbf16>
    %cst = arith.constant dense<0.000000e+00> : vector<8x128xf32>
    %4 = tpu.matmul %1, %3, %cst {dimension_numbers = #tpu.dot_dimension_numbers<[1], [0], [0], [1], [0, 0, 1, 1], [], []>} : vector<8x128xbf16>, vector<128x128xbf16>, vector<8x128xf32> -> vector<8x128xf32>
    %c0_4 = arith.constant 0 : index
    %c0_5 = arith.constant 0 : index
    %5 = vector.load %arg3[%c0_4, %c0_5] : memref<7x128xf32, #tpu.memory_space<vmem>>, vector<1x128xf32>
    %6 = vector.broadcast %5 : vector<1x128xf32> to vector<8x128xf32>
    %7 = arith.addf %4, %6 : vector<8x128xf32>
    %8 = arith.truncf %7 : vector<8x128xf32> to vector<8x128xbf16>
    %c1 = arith.constant 1 : index
    %c0_6 = arith.constant 0 : index
    %c0_7 = arith.constant 0 : index
    %9 = vector.load %arg2[%c1, %c0_6, %c0_7] : memref<7x128x128xbf16, #tpu.memory_space<vmem>>, vector<1x128x128xbf16>
    %10 = vector.shape_cast %9 : vector<1x128x128xbf16> to vector<128x128xbf16>
    %cst_8 = arith.constant dense<0.000000e+00> : vector<8x128xf32>
    %11 = tpu.matmul %8, %10, %cst_8 {dimension_numbers = #tpu.dot_dimension_numbers<[1], [0], [0], [1], [0, 0, 1, 1], [], []>} : vector<8x128xbf16>, vector<128x128xbf16>, vector<8x128xf32> -> vector<8x128xf32>
    %c1_9 = arith.constant 1 : index
    %c0_10 = arith.constant 0 : index
    %12 = vector.load %arg3[%c1_9, %c0_10] : memref<7x128xf32, #tpu.memory_space<vmem>>, vector<1x128xf32>
    %13 = vector.broadcast %12 : vector<1x128xf32> to vector<8x128xf32>
    %14 = arith.addf %11, %13 : vector<8x128xf32>
    %cst_11 = arith.constant 0.000000e+00 : f32
    %15 = vector.broadcast %cst_11 : f32 to vector<8x128xf32>
    %16 = arith.maximumf %14, %15 : vector<8x128xf32>
    %17 = arith.truncf %16 : vector<8x128xf32> to vector<8x128xbf16>
    %c2 = arith.constant 2 : index
    %c0_12 = arith.constant 0 : index
    %c0_13 = arith.constant 0 : index
    %18 = vector.load %arg2[%c2, %c0_12, %c0_13] : memref<7x128x128xbf16, #tpu.memory_space<vmem>>, vector<1x128x128xbf16>
    %19 = vector.shape_cast %18 : vector<1x128x128xbf16> to vector<128x128xbf16>
    %cst_14 = arith.constant dense<0.000000e+00> : vector<8x128xf32>
    %20 = tpu.matmul %17, %19, %cst_14 {dimension_numbers = #tpu.dot_dimension_numbers<[1], [0], [0], [1], [0, 0, 1, 1], [], []>} : vector<8x128xbf16>, vector<128x128xbf16>, vector<8x128xf32> -> vector<8x128xf32>
    %c2_15 = arith.constant 2 : index
    %c0_16 = arith.constant 0 : index
    %21 = vector.load %arg3[%c2_15, %c0_16] : memref<7x128xf32, #tpu.memory_space<vmem>>, vector<1x128xf32>
    %22 = vector.broadcast %21 : vector<1x128xf32> to vector<8x128xf32>
    %23 = arith.addf %20, %22 : vector<8x128xf32>
    %24 = arith.addf %23, %7 : vector<8x128xf32>
    %cst_17 = arith.constant 0.000000e+00 : f32
    %25 = vector.broadcast %cst_17 : f32 to vector<8x128xf32>
    %26 = arith.maximumf %24, %25 : vector<8x128xf32>
    %27 = arith.truncf %26 : vector<8x128xf32> to vector<8x128xbf16>
    %c3 = arith.constant 3 : index
    %c0_18 = arith.constant 0 : index
    %c0_19 = arith.constant 0 : index
    %28 = vector.load %arg2[%c3, %c0_18, %c0_19] : memref<7x128x128xbf16, #tpu.memory_space<vmem>>, vector<1x128x128xbf16>
    %29 = vector.shape_cast %28 : vector<1x128x128xbf16> to vector<128x128xbf16>
    %cst_20 = arith.constant dense<0.000000e+00> : vector<8x128xf32>
    %30 = tpu.matmul %27, %29, %cst_20 {dimension_numbers = #tpu.dot_dimension_numbers<[1], [0], [0], [1], [0, 0, 1, 1], [], []>} : vector<8x128xbf16>, vector<128x128xbf16>, vector<8x128xf32> -> vector<8x128xf32>
    %c3_21 = arith.constant 3 : index
    %c0_22 = arith.constant 0 : index
    %31 = vector.load %arg3[%c3_21, %c0_22] : memref<7x128xf32, #tpu.memory_space<vmem>>, vector<1x128xf32>
    %32 = vector.broadcast %31 : vector<1x128xf32> to vector<8x128xf32>
    %33 = arith.addf %30, %32 : vector<8x128xf32>
    %34 = arith.truncf %33 : vector<8x128xf32> to vector<8x128xbf16>
    %c4 = arith.constant 4 : index
    %c0_23 = arith.constant 0 : index
    %c0_24 = arith.constant 0 : index
    %35 = vector.load %arg2[%c4, %c0_23, %c0_24] : memref<7x128x128xbf16, #tpu.memory_space<vmem>>, vector<1x128x128xbf16>
    %36 = vector.shape_cast %35 : vector<1x128x128xbf16> to vector<128x128xbf16>
    %cst_25 = arith.constant dense<0.000000e+00> : vector<8x128xf32>
    %37 = tpu.matmul %34, %36, %cst_25 {dimension_numbers = #tpu.dot_dimension_numbers<[1], [0], [0], [1], [0, 0, 1, 1], [], []>} : vector<8x128xbf16>, vector<128x128xbf16>, vector<8x128xf32> -> vector<8x128xf32>
    %c4_26 = arith.constant 4 : index
    %c0_27 = arith.constant 0 : index
    %38 = vector.load %arg3[%c4_26, %c0_27] : memref<7x128xf32, #tpu.memory_space<vmem>>, vector<1x128xf32>
    %39 = vector.broadcast %38 : vector<1x128xf32> to vector<8x128xf32>
    %40 = arith.addf %37, %39 : vector<8x128xf32>
    %cst_28 = arith.constant 0.000000e+00 : f32
    %41 = vector.broadcast %cst_28 : f32 to vector<8x128xf32>
    %42 = arith.maximumf %40, %41 : vector<8x128xf32>
    %43 = arith.truncf %42 : vector<8x128xf32> to vector<8x128xbf16>
    %c5 = arith.constant 5 : index
    %c0_29 = arith.constant 0 : index
    %c0_30 = arith.constant 0 : index
    %44 = vector.load %arg2[%c5, %c0_29, %c0_30] : memref<7x128x128xbf16, #tpu.memory_space<vmem>>, vector<1x128x128xbf16>
    %45 = vector.shape_cast %44 : vector<1x128x128xbf16> to vector<128x128xbf16>
    %cst_31 = arith.constant dense<0.000000e+00> : vector<8x128xf32>
    %46 = tpu.matmul %43, %45, %cst_31 {dimension_numbers = #tpu.dot_dimension_numbers<[1], [0], [0], [1], [0, 0, 1, 1], [], []>} : vector<8x128xbf16>, vector<128x128xbf16>, vector<8x128xf32> -> vector<8x128xf32>
    %c5_32 = arith.constant 5 : index
    %c0_33 = arith.constant 0 : index
    %47 = vector.load %arg3[%c5_32, %c0_33] : memref<7x128xf32, #tpu.memory_space<vmem>>, vector<1x128xf32>
    %48 = vector.broadcast %47 : vector<1x128xf32> to vector<8x128xf32>
    %49 = arith.addf %46, %48 : vector<8x128xf32>
    %50 = arith.addf %49, %33 : vector<8x128xf32>
    %cst_34 = arith.constant 0.000000e+00 : f32
    %51 = vector.broadcast %cst_34 : f32 to vector<8x128xf32>
    %52 = arith.maximumf %50, %51 : vector<8x128xf32>
    %53 = arith.truncf %52 : vector<8x128xf32> to vector<8x128xbf16>
    %c6 = arith.constant 6 : index
    %c0_35 = arith.constant 0 : index
    %c0_36 = arith.constant 0 : index
    %54 = vector.load %arg2[%c6, %c0_35, %c0_36] : memref<7x128x128xbf16, #tpu.memory_space<vmem>>, vector<1x128x128xbf16>
    %55 = vector.shape_cast %54 : vector<1x128x128xbf16> to vector<128x128xbf16>
    %cst_37 = arith.constant dense<0.000000e+00> : vector<8x128xf32>
    %56 = tpu.matmul %53, %55, %cst_37 {dimension_numbers = #tpu.dot_dimension_numbers<[1], [0], [0], [1], [0, 0, 1, 1], [], []>} : vector<8x128xbf16>, vector<128x128xbf16>, vector<8x128xf32> -> vector<8x128xf32>
    %c6_38 = arith.constant 6 : index
    %c0_39 = arith.constant 0 : index
    %57 = vector.load %arg3[%c6_38, %c0_39] : memref<7x128xf32, #tpu.memory_space<vmem>>, vector<1x128xf32>
    %58 = vector.broadcast %57 : vector<1x128xf32> to vector<8x128xf32>
    %59 = arith.addf %56, %58 : vector<8x128xf32>
    %c0_40 = arith.constant 0 : index
    %c0_41 = arith.constant 0 : index
    %60 = vector.load %arg4[%c0_40, %c0_41] : memref<8x128xf32, #tpu.memory_space<vmem>>, vector<8x128xf32>
    tpu.vector_store %arg4[%c0_40, %c0_41], %59 {strides = array<i32>} : memref<8x128xf32, #tpu.memory_space<vmem>>, vector<8x128xf32>,
    return
  }
  func.func @transform_0(%arg0: i32) -> (i32, i32) {
    %c0_i32 = arith.constant 0 : i32
    %c0_i32_0 = arith.constant 0 : i32
    return %arg0, %c0_i32 : i32, i32
  }
  func.func @transform_1(%arg0: i32) -> (i32, i32, i32) {
    %c0_i32 = arith.constant 0 : i32
    %c0_i32_0 = arith.constant 0 : i32
    %c0_i32_1 = arith.constant 0 : i32
    %c0_i32_2 = arith.constant 0 : i32
    return %c0_i32, %c0_i32_0, %c0_i32_1 : i32, i32, i32
  }
  func.func @transform_2(%arg0: i32) -> (i32, i32) {
    %c0_i32 = arith.constant 0 : i32
    %c0_i32_0 = arith.constant 0 : i32
    %c0_i32_1 = arith.constant 0 : i32
    return %c0_i32, %c0_i32_0 : i32, i32
  }
  func.func @transform_3(%arg0: i32) -> (i32, i32) {
    %c0_i32 = arith.constant 0 : i32
    %c0_i32_0 = arith.constant 0 : i32
    return %arg0, %c0_i32 : i32, i32
  }
}

</mosaic_0001>

<llo_original>
// kernel: simple_mlp_residual.1
$region0: #{simple_mlp_residual.1}
  #allocation0 [shape = 'u32[]', space=smem, size = 0x4, offset = 0x4, fixed_abs, tag = 'smem constant byte address 0x4 - core index']
  #allocation1 [shape = 'u32[144,128]{1,0:T(1,128)}', space=vmem, size = 0x12000, scoped, tag = 'internal scratch']
  %s0 = inlined_call_operand.vmem [shape: f32[8,128], index: 0, kind: input, shape index: {}]
  %s1 = inlined_call_operand.hbm [shape: bf16[7,128,128], index: 1, kind: input, shape index: {}]
  %s2 = inlined_call_operand.vmem [shape: f32[7,128], index: 2, kind: input, shape index: {}]
  %s3 = inlined_call_operand.hbm [shape: f32[8,128], index: 3, kind: output, shape index: {}]
  %s4 = sld [smem:[#allocation0]]
  $region26: #{simple_mlp_residual.1} parent=0
    _
  %s6 = ssub.s32 1, %s4
  %s7 = scalar_select 0, %s6, %s4
  $region1: #{simple_mlp_residual.1} parent=0
    #allocation2 [shape = 'u8[229376]{0}', space=vmem, size = 0x38000, scoped, tag = 'input window, operand 1, single buffered']
    #allocation3 [shape = 's32[1]{0}', space=sflag, size = 0x4, scoped, tag = 'scoped memory for simple_mlp_residual.1']
    #allocation4 [shape = 's32[1]{0}', space=sflag, size = 0x4, scoped, tag = 'scoped memory for simple_mlp_residual.1']
    #allocation5 [shape = 'u8[4096]{0}', space=vmem, size = 0x1000, scoped, tag = 'output window, operand 0, single buffered']
    %8 = vsyncpa [#allocation3], 0
    %9 = vsyncpa [#allocation4], 0
    // Predicated region
    $region2: #{simple_mlp_residual.1} parent=1 // pred_check
      _
    $region3: #{simple_mlp_residual.1} parent=1 // pred_check_branch
      %11 = sbr.rel (0) target = $region5
    $region4: #{simple_mlp_residual.1} parent=1 // pred_region
      _
    $region5: #{simple_mlp_residual.1} parent=1 // pred_fallthru
      _
    // Predicated region
    $region6: #{simple_mlp_residual.1} parent=1 // pred_check
      _
    $region7: #{simple_mlp_residual.1} parent=1 // pred_check_branch
      %13 = sbr.rel (0) target = $region9
    $region8: #{simple_mlp_residual.1} parent=1 // pred_region
      %s15 = ssub.s32 7168, 7168
      %16 = vsyncadd [#allocation3], %s15
      %s17 = sshll.u32 [#allocation2], 4
      %s18 = int_to_ptr.vmem [resolvable:$true] %s17
      %23 = dma.hbm_to_vmem [thread:$0]  %s1, 7168, %s18, [#allocation3], 64, 64, 4
    $region9: #{simple_mlp_residual.1} parent=1 // pred_fallthru
      _
    // Predicated region
    $region10: #{simple_mlp_residual.1} parent=1 // pred_check
      _
    $region11: #{simple_mlp_residual.1} parent=1 // pred_check_branch
      %25 = sbr.rel (0) target = $region13
    $region12: #{simple_mlp_residual.1} parent=1 // pred_region
      _
    $region13: #{simple_mlp_residual.1} parent=1 // pred_fallthru
      _
    // Predicated region
    $region14: #{simple_mlp_residual.1} parent=1 // pred_check
      _
    $region15: #{simple_mlp_residual.1} parent=1 // pred_check_branch
      %27 = sbr.rel (0) target = $region17
    $region16: #{simple_mlp_residual.1} parent=1 // pred_region
      %28 = dma.done [#allocation3], 7168
    $region17: #{simple_mlp_residual.1} parent=1 // pred_fallthru
      _
    %v30 = vld [vmem:[%s0] sm:$0xff]
    %v31 = vpack.c.bf16 %v30, %v30
    %v32 = vld [vmem:[#allocation2] sm:$0xf]
    %v33 = vld [vmem:[#allocation2 + $0x4] sm:$0xf]
    %v34 = vld [vmem:[#allocation2 + $0x8] sm:$0xf]
    %v35 = vld [vmem:[#allocation2 + $0xc] sm:$0xf]
    %v36 = vld [vmem:[#allocation2 + $0x10] sm:$0xf]
    %v37 = vld [vmem:[#allocation2 + $0x14] sm:$0xf]
    %v38 = vld [vmem:[#allocation2 + $0x18] sm:$0xf]
    %v39 = vld [vmem:[#allocation2 + $0x1c] sm:$0xf]
    %v40 = vld [vmem:[#allocation2 + $0x20] sm:$0xf]
    %v41 = vld [vmem:[#allocation2 + $0x24] sm:$0xf]
    %v42 = vld [vmem:[#allocation2 + $0x28] sm:$0xf]
    %v43 = vld [vmem:[#allocation2 + $0x2c] sm:$0xf]
    %v44 = vld [vmem:[#allocation2 + $0x30] sm:$0xf]
    %v45 = vld [vmem:[#allocation2 + $0x34] sm:$0xf]
    %v46 = vld [vmem:[#allocation2 + $0x38] sm:$0xf]
    %v47 = vld [vmem:[#allocation2 + $0x3c] sm:$0xf]
    %v48 = vld [vmem:[%s2] sm:$0x1]
    %v49 = vlaneseq
    %v50 = vshrl.u32 %v49, 7
    %v51 = vsub.s32 0, %v50
    %v52 = vrot.slane %v48, %v51
    %v69 = vunpack.c.l.b16 %v32
    %v70 = vunpack.c.l.b16 %v33
    %v71 = vunpack.c.l.b16 %v34
    %v72 = vunpack.c.l.b16 %v35
    %v73 = vunpack.c.l.b16 %v36
    %v74 = vunpack.c.l.b16 %v37
    %v75 = vunpack.c.l.b16 %v38
    %v76 = vunpack.c.l.b16 %v39
    %v77 = vunpack.c.l.b16 %v40
    %v78 = vunpack.c.l.b16 %v41
    %v79 = vunpack.c.l.b16 %v42
    %v80 = vunpack.c.l.b16 %v43
    %v81 = vunpack.c.l.b16 %v44
    %v82 = vunpack.c.l.b16 %v45
    %v83 = vunpack.c.l.b16 %v46
    %v84 = vunpack.c.l.b16 %v47
    %v85 = vpack.c.b16 %v70, %v69
    %v86 = vpack.c.b16 %v72, %v71
    %v87 = vpack.c.b16 %v74, %v73
    %v88 = vpack.c.b16 %v76, %v75
    %v89 = vpack.c.b16 %v78, %v77
    %v90 = vpack.c.b16 %v80, %v79
    %v91 = vpack.c.b16 %v82, %v81
    %v92 = vpack.c.b16 %v84, %v83
    %101 = vmatprep.subr.bf16.mxu0 0
    %102 = vmatpush1.bf16.msra.mxu0 %v85
    %103 = vmatprep.subr.bf16.mxu0 0
    %104 = vmatpush1.bf16.msra.mxu0 %v86
    %105 = vmatprep.subr.bf16.mxu0 0
    %106 = vmatpush1.bf16.msra.mxu0 %v87
    %107 = vmatprep.subr.bf16.mxu0 0
    %108 = vmatpush1.bf16.msra.mxu0 %v88
    %109 = vmatprep.subr.bf16.mxu0 0
    %110 = vmatpush1.bf16.msra.mxu0 %v89
    %111 = vmatprep.subr.bf16.mxu0 0
    %112 = vmatpush1.bf16.msra.mxu0 %v90
    %113 = vmatprep.subr.bf16.mxu0 0
    %114 = vmatpush1.bf16.msra.mxu0 %v91
    %115 = vmatprep.subr.bf16.mxu0 0
    %116 = vmatpush1.bf16.msra.mxu0 %v92
    %117 = vmatprep.subr.bf16.mxu0 0
    %118 = vmatpush1.bf16.msra.mxu0 0
    %119 = vmatprep.subr.bf16.mxu0 0
    %120 = vmatpush1.bf16.msra.mxu0 0
    %121 = vmatprep.subr.bf16.mxu0 0
    %122 = vmatpush1.bf16.msra.mxu0 0
    %123 = vmatprep.subr.bf16.mxu0 0
    %124 = vmatpush1.bf16.msra.mxu0 0
    %125 = vmatprep.subr.bf16.mxu0 0
    %126 = vmatpush1.bf16.msra.mxu0 0
    %127 = vmatprep.subr.bf16.mxu0 0
    %128 = vmatpush1.bf16.msra.mxu0 0
    %129 = vmatprep.subr.bf16.mxu0 0
    %130 = vmatpush1.bf16.msra.mxu0 0
    %131 = vmatprep.subr.bf16.mxu0 0
    %132 = vmatpush1.bf16.msra.mxu0 0
    %133 = vmatprep.mubr.bf16.mxu0 0
    %134 = vmatmul.mubr.bf16.gmra.mrb[0].mxu0 %v31
    %v135 = vpop.f32.mrb[0].mxu0
    %v136 = vadd.f32 %v52, %v135
    %v137 = vpop.f32.mrb[0].mxu0
    %v138 = vpop.f32.mrb[0].mxu0
    %v139 = vpop.f32.mrb[0].mxu0
    %140 = vdwg.mxu0
    %v141 = vpack.c.bf16 %v136, %v136
    %s142 = scalar_lea.vmem [#allocation2], 64
    %v143 = vld [vmem:[%s142] sm:$0xf]
    %v144 = vld [vmem:[%s142 + $0x4] sm:$0xf]
    %v145 = vld [vmem:[%s142 + $0x8] sm:$0xf]
    %v146 = vld [vmem:[%s142 + $0xc] sm:$0xf]
    %v147 = vld [vmem:[%s142 + $0x10] sm:$0xf]
    %v148 = vld [vmem:[%s142 + $0x14] sm:$0xf]
    %v149 = vld [vmem:[%s142 + $0x18] sm:$0xf]
    %v150 = vld [vmem:[%s142 + $0x1c] sm:$0xf]
    %v151 = vld [vmem:[%s142 + $0x20] sm:$0xf]
    %v152 = vld [vmem:[%s142 + $0x24] sm:$0xf]
    %v153 = vld [vmem:[%s142 + $0x28] sm:$0xf]
    %v154 = vld [vmem:[%s142 + $0x2c] sm:$0xf]
    %v155 = vld [vmem:[%s142 + $0x30] sm:$0xf]
    %v156 = vld [vmem:[%s142 + $0x34] sm:$0xf]
    %v157 = vld [vmem:[%s142 + $0x38] sm:$0xf]
    %v158 = vld [vmem:[%s142 + $0x3c] sm:$0xf]
    %v159 = vld [vmem:[%s2 + $0x1] sm:$0x1]
    %v160 = vlaneseq
    %v161 = vshrl.u32 %v160, 7
    %v162 = vsub.s32 0, %v161
    %v163 = vrot.slane %v159, %v162
    %v180 = vunpack.c.l.b16 %v143
    %v181 = vunpack.c.l.b16 %v144
    %v182 = vunpack.c.l.b16 %v145
    %v183 = vunpack.c.l.b16 %v146
    %v184 = vunpack.c.l.b16 %v147
    %v185 = vunpack.c.l.b16 %v148
    %v186 = vunpack.c.l.b16 %v149
    %v187 = vunpack.c.l.b16 %v150
    %v188 = vunpack.c.l.b16 %v151
    %v189 = vunpack.c.l.b16 %v152
    %v190 = vunpack.c.l.b16 %v153
    %v191 = vunpack.c.l.b16 %v154
    %v192 = vunpack.c.l.b16 %v155
    %v193 = vunpack.c.l.b16 %v156
    %v194 = vunpack.c.l.b16 %v157
    %v195 = vunpack.c.l.b16 %v158
    %v196 = vpack.c.b16 %v181, %v180
    %v197 = vpack.c.b16 %v183, %v182
    %v198 = vpack.c.b16 %v185, %v184
    %v199 = vpack.c.b16 %v187, %v186
    %v200 = vpack.c.b16 %v189, %v188
    %v201 = vpack.c.b16 %v191, %v190
    %v202 = vpack.c.b16 %v193, %v192
    %v203 = vpack.c.b16 %v195, %v194
    %212 = vmatprep.subr.bf16.mxu0 0
    %213 = vmatpush1.bf16.msra.mxu0 %v196
    %214 = vmatprep.subr.bf16.mxu0 0
    %215 = vmatpush1.bf16.msra.mxu0 %v197
    %216 = vmatprep.subr.bf16.mxu0 0
    %217 = vmatpush1.bf16.msra.mxu0 %v198
    %218 = vmatprep.subr.bf16.mxu0 0
    %219 = vmatpush1.bf16.msra.mxu0 %v199
    %220 = vmatprep.subr.bf16.mxu0 0
    %221 = vmatpush1.bf16.msra.mxu0 %v200
    %222 = vmatprep.subr.bf16.mxu0 0
    %223 = vmatpush1.bf16.msra.mxu0 %v201
    %224 = vmatprep.subr.bf16.mxu0 0
    %225 = vmatpush1.bf16.msra.mxu0 %v202
    %226 = vmatprep.subr.bf16.mxu0 0
    %227 = vmatpush1.bf16.msra.mxu0 %v203
    %228 = vmatprep.subr.bf16.mxu0 0
    %229 = vmatpush1.bf16.msra.mxu0 0
    %230 = vmatprep.subr.bf16.mxu0 0
    %231 = vmatpush1.bf16.msra.mxu0 0
    %232 = vmatprep.subr.bf16.mxu0 0
    %233 = vmatpush1.bf16.msra.mxu0 0
    %234 = vmatprep.subr.bf16.mxu0 0
    %235 = vmatpush1.bf16.msra.mxu0 0
    %236 = vmatprep.subr.bf16.mxu0 0
    %237 = vmatpush1.bf16.msra.mxu0 0
    %238 = vmatprep.subr.bf16.mxu0 0
    %239 = vmatpush1.bf16.msra.mxu0 0
    %240 = vmatprep.subr.bf16.mxu0 0
    %241 = vmatpush1.bf16.msra.mxu0 0
    %242 = vmatprep.subr.bf16.mxu0 0
    %243 = vmatpush1.bf16.msra.mxu0 0
    %244 = vmatprep.mubr.bf16.mxu0 0
    %245 = vmatmul.mubr.bf16.gmra.mrb[0].mxu0 %v141
    %v246 = vpop.f32.mrb[0].mxu0
    %v247 = vadd.f32 %v163, %v246
    %v248 = vpop.f32.mrb[0].mxu0
    %v249 = vpop.f32.mrb[0].mxu0
    %v250 = vpop.f32.mrb[0].mxu0
    %251 = vdwg.mxu0
    %v252 = vmax.f32 %v247, 0.0
    %v253 = vpack.c.bf16 %v252, %v252
    %s254 = scalar_lea.vmem [#allocation2], 128
    %v255 = vld [vmem:[%s254] sm:$0xf]
    %v256 = vld [vmem:[%s254 + $0x4] sm:$0xf]
    %v257 = vld [vmem:[%s254 + $0x8] sm:$0xf]
    %v258 = vld [vmem:[%s254 + $0xc] sm:$0xf]
    %v259 = vld [vmem:[%s254 + $0x10] sm:$0xf]
    %v260 = vld [vmem:[%s254 + $0x14] sm:$0xf]
    %v261 = vld [vmem:[%s254 + $0x18] sm:$0xf]
    %v262 = vld [vmem:[%s254 + $0x1c] sm:$0xf]
    %v263 = vld [vmem:[%s254 + $0x20] sm:$0xf]
    %v264 = vld [vmem:[%s254 + $0x24] sm:$0xf]
    %v265 = vld [vmem:[%s254 + $0x28] sm:$0xf]
    %v266 = vld [vmem:[%s254 + $0x2c] sm:$0xf]
    %v267 = vld [vmem:[%s254 + $0x30] sm:$0xf]
    %v268 = vld [vmem:[%s254 + $0x34] sm:$0xf]
    %v269 = vld [vmem:[%s254 + $0x38] sm:$0xf]
    %v270 = vld [vmem:[%s254 + $0x3c] sm:$0xf]
    %v271 = vld [vmem:[%s2 + $0x2] sm:$0x1]
    %v272 = vlaneseq
    %v273 = vshrl.u32 %v272, 7
    %v274 = vsub.s32 0, %v273
    %v275 = vrot.slane %v271, %v274
    %v292 = vunpack.c.l.b16 %v255
    %v293 = vunpack.c.l.b16 %v256
    %v294 = vunpack.c.l.b16 %v257
    %v295 = vunpack.c.l.b16 %v258
    %v296 = vunpack.c.l.b16 %v259
    %v297 = vunpack.c.l.b16 %v260
    %v298 = vunpack.c.l.b16 %v261
    %v299 = vunpack.c.l.b16 %v262
    %v300 = vunpack.c.l.b16 %v263
    %v301 = vunpack.c.l.b16 %v264
    %v302 = vunpack.c.l.b16 %v265
    %v303 = vunpack.c.l.b16 %v266
    %v304 = vunpack.c.l.b16 %v267
    %v305 = vunpack.c.l.b16 %v268
    %v306 = vunpack.c.l.b16 %v269
    %v307 = vunpack.c.l.b16 %v270
    %v308 = vpack.c.b16 %v293, %v292
    %v309 = vpack.c.b16 %v295, %v294
    %v310 = vpack.c.b16 %v297, %v296
    %v311 = vpack.c.b16 %v299, %v298
    %v312 = vpack.c.b16 %v301, %v300
    %v313 = vpack.c.b16 %v303, %v302
    %v314 = vpack.c.b16 %v305, %v304
    %v315 = vpack.c.b16 %v307, %v306
    %324 = vmatprep.subr.bf16.mxu0 0
    %325 = vmatpush1.bf16.msra.mxu0 %v308
    %326 = vmatprep.subr.bf16.mxu0 0
    %327 = vmatpush1.bf16.msra.mxu0 %v309
    %328 = vmatprep.subr.bf16.mxu0 0
    %329 = vmatpush1.bf16.msra.mxu0 %v310
    %330 = vmatprep.subr.bf16.mxu0 0
    %331 = vmatpush1.bf16.msra.mxu0 %v311
    %332 = vmatprep.subr.bf16.mxu0 0
    %333 = vmatpush1.bf16.msra.mxu0 %v312
    %334 = vmatprep.subr.bf16.mxu0 0
    %335 = vmatpush1.bf16.msra.mxu0 %v313
    %336 = vmatprep.subr.bf16.mxu0 0
    %337 = vmatpush1.bf16.msra.mxu0 %v314
    %338 = vmatprep.subr.bf16.mxu0 0
    %339 = vmatpush1.bf16.msra.mxu0 %v315
    %340 = vmatprep.subr.bf16.mxu0 0
    %341 = vmatpush1.bf16.msra.mxu0 0
    %342 = vmatprep.subr.bf16.mxu0 0
    %343 = vmatpush1.bf16.msra.mxu0 0
    %344 = vmatprep.subr.bf16.mxu0 0
    %345 = vmatpush1.bf16.msra.mxu0 0
    %346 = vmatprep.subr.bf16.mxu0 0
    %347 = vmatpush1.bf16.msra.mxu0 0
    %348 = vmatprep.subr.bf16.mxu0 0
    %349 = vmatpush1.bf16.msra.mxu0 0
    %350 = vmatprep.subr.bf16.mxu0 0
    %351 = vmatpush1.bf16.msra.mxu0 0
    %352 = vmatprep.subr.bf16.mxu0 0
    %353 = vmatpush1.bf16.msra.mxu0 0
    %354 = vmatprep.subr.bf16.mxu0 0
    %355 = vmatpush1.bf16.msra.mxu0 0
    %356 = vmatprep.mubr.bf16.mxu0 0
    %357 = vmatmul.mubr.bf16.gmra.mrb[0].mxu0 %v253
    %v358 = vpop.f32.mrb[0].mxu0
    %v359 = vadd.f32 %v275, %v358
    %v360 = vpop.f32.mrb[0].mxu0
    %v361 = vpop.f32.mrb[0].mxu0
    %v362 = vpop.f32.mrb[0].mxu0
    %363 = vdwg.mxu0
    %v364 = vadd.f32 %v359, %v136
    %v365 = vmax.f32 %v364, 0.0
    %v366 = vpack.c.bf16 %v365, %v365
    %s367 = scalar_lea.vmem [#allocation2], 192
    %v368 = vld [vmem:[%s367] sm:$0xf]
    %v369 = vld [vmem:[%s367 + $0x4] sm:$0xf]
    %v370 = vld [vmem:[%s367 + $0x8] sm:$0xf]
    %v371 = vld [vmem:[%s367 + $0xc] sm:$0xf]
    %v372 = vld [vmem:[%s367 + $0x10] sm:$0xf]
    %v373 = vld [vmem:[%s367 + $0x14] sm:$0xf]
    %v374 = vld [vmem:[%s367 + $0x18] sm:$0xf]
    %v375 = vld [vmem:[%s367 + $0x1c] sm:$0xf]
    %v376 = vld [vmem:[%s367 + $0x20] sm:$0xf]
    %v377 = vld [vmem:[%s367 + $0x24] sm:$0xf]
    %v378 = vld [vmem:[%s367 + $0x28] sm:$0xf]
    %v379 = vld [vmem:[%s367 + $0x2c] sm:$0xf]
    %v380 = vld [vmem:[%s367 + $0x30] sm:$0xf]
    %v381 = vld [vmem:[%s367 + $0x34] sm:$0xf]
    %v382 = vld [vmem:[%s367 + $0x38] sm:$0xf]
    %v383 = vld [vmem:[%s367 + $0x3c] sm:$0xf]
    %v384 = vld [vmem:[%s2 + $0x3] sm:$0x1]
    %v385 = vlaneseq
    %v386 = vshrl.u32 %v385, 7
    %v387 = vsub.s32 0, %v386
    %v388 = vrot.slane %v384, %v387
    %v405 = vunpack.c.l.b16 %v368
    %v406 = vunpack.c.l.b16 %v369
    %v407 = vunpack.c.l.b16 %v370
    %v408 = vunpack.c.l.b16 %v371
    %v409 = vunpack.c.l.b16 %v372
    %v410 = vunpack.c.l.b16 %v373
    %v411 = vunpack.c.l.b16 %v374
    %v412 = vunpack.c.l.b16 %v375
    %v413 = vunpack.c.l.b16 %v376
    %v414 = vunpack.c.l.b16 %v377
    %v415 = vunpack.c.l.b16 %v378
    %v416 = vunpack.c.l.b16 %v379
    %v417 = vunpack.c.l.b16 %v380
    %v418 = vunpack.c.l.b16 %v381
    %v419 = vunpack.c.l.b16 %v382
    %v420 = vunpack.c.l.b16 %v383
    %v421 = vpack.c.b16 %v406, %v405
    %v422 = vpack.c.b16 %v408, %v407
    %v423 = vpack.c.b16 %v410, %v409
    %v424 = vpack.c.b16 %v412, %v411
    %v425 = vpack.c.b16 %v414, %v413
    %v426 = vpack.c.b16 %v416, %v415
    %v427 = vpack.c.b16 %v418, %v417
    %v428 = vpack.c.b16 %v420, %v419
    %437 = vmatprep.subr.bf16.mxu0 0
    %438 = vmatpush1.bf16.msra.mxu0 %v421
    %439 = vmatprep.subr.bf16.mxu0 0
    %440 = vmatpush1.bf16.msra.mxu0 %v422
    %441 = vmatprep.subr.bf16.mxu0 0
    %442 = vmatpush1.bf16.msra.mxu0 %v423
    %443 = vmatprep.subr.bf16.mxu0 0
    %444 = vmatpush1.bf16.msra.mxu0 %v424
    %445 = vmatprep.subr.bf16.mxu0 0
    %446 = vmatpush1.bf16.msra.mxu0 %v425
    %447 = vmatprep.subr.bf16.mxu0 0
    %448 = vmatpush1.bf16.msra.mxu0 %v426
    %449 = vmatprep.subr.bf16.mxu0 0
    %450 = vmatpush1.bf16.msra.mxu0 %v427
    %451 = vmatprep.subr.bf16.mxu0 0
    %452 = vmatpush1.bf16.msra.mxu0 %v428
    %453 = vmatprep.subr.bf16.mxu0 0
    %454 = vmatpush1.bf16.msra.mxu0 0
    %455 = vmatprep.subr.bf16.mxu0 0
    %456 = vmatpush1.bf16.msra.mxu0 0
    %457 = vmatprep.subr.bf16.mxu0 0
    %458 = vmatpush1.bf16.msra.mxu0 0
    %459 = vmatprep.subr.bf16.mxu0 0
    %460 = vmatpush1.bf16.msra.mxu0 0
    %461 = vmatprep.subr.bf16.mxu0 0
    %462 = vmatpush1.bf16.msra.mxu0 0
    %463 = vmatprep.subr.bf16.mxu0 0
    %464 = vmatpush1.bf16.msra.mxu0 0
    %465 = vmatprep.subr.bf16.mxu0 0
    %466 = vmatpush1.bf16.msra.mxu0 0
    %467 = vmatprep.subr.bf16.mxu0 0
    %468 = vmatpush1.bf16.msra.mxu0 0
    %469 = vmatprep.mubr.bf16.mxu0 0
    %470 = vmatmul.mubr.bf16.gmra.mrb[0].mxu0 %v366
    %v471 = vpop.f32.mrb[0].mxu0
    %v472 = vadd.f32 %v388, %v471
    %v473 = vpop.f32.mrb[0].mxu0
    %v474 = vpop.f32.mrb[0].mxu0
    %v475 = vpop.f32.mrb[0].mxu0
    %476 = vdwg.mxu0
    %v477 = vpack.c.bf16 %v472, %v472
    %s478 = scalar_lea.vmem [#allocation2], 256
    %v479 = vld [vmem:[%s478] sm:$0xf]
    %v480 = vld [vmem:[%s478 + $0x4] sm:$0xf]
    %v481 = vld [vmem:[%s478 + $0x8] sm:$0xf]
    %v482 = vld [vmem:[%s478 + $0xc] sm:$0xf]
    %v483 = vld [vmem:[%s478 + $0x10] sm:$0xf]
    %v484 = vld [vmem:[%s478 + $0x14] sm:$0xf]
    %v485 = vld [vmem:[%s478 + $0x18] sm:$0xf]
    %v486 = vld [vmem:[%s478 + $0x1c] sm:$0xf]
    %v487 = vld [vmem:[%s478 + $0x20] sm:$0xf]
    %v488 = vld [vmem:[%s478 + $0x24] sm:$0xf]
    %v489 = vld [vmem:[%s478 + $0x28] sm:$0xf]
    %v490 = vld [vmem:[%s478 + $0x2c] sm:$0xf]
    %v491 = vld [vmem:[%s478 + $0x30] sm:$0xf]
    %v492 = vld [vmem:[%s478 + $0x34] sm:$0xf]
    %v493 = vld [vmem:[%s478 + $0x38] sm:$0xf]
    %v494 = vld [vmem:[%s478 + $0x3c] sm:$0xf]
    %v495 = vld [vmem:[%s2 + $0x4] sm:$0x1]
    %v496 = vlaneseq
    %v497 = vshrl.u32 %v496, 7
    %v498 = vsub.s32 0, %v497
    %v499 = vrot.slane %v495, %v498
    %v516 = vunpack.c.l.b16 %v479
    %v517 = vunpack.c.l.b16 %v480
    %v518 = vunpack.c.l.b16 %v481
    %v519 = vunpack.c.l.b16 %v482
    %v520 = vunpack.c.l.b16 %v483
    %v521 = vunpack.c.l.b16 %v484
    %v522 = vunpack.c.l.b16 %v485
    %v523 = vunpack.c.l.b16 %v486
    %v524 = vunpack.c.l.b16 %v487
    %v525 = vunpack.c.l.b16 %v488
    %v526 = vunpack.c.l.b16 %v489
    %v527 = vunpack.c.l.b16 %v490
    %v528 = vunpack.c.l.b16 %v491
    %v529 = vunpack.c.l.b16 %v492
    %v530 = vunpack.c.l.b16 %v493
    %v531 = vunpack.c.l.b16 %v494
    %v532 = vpack.c.b16 %v517, %v516
    %v533 = vpack.c.b16 %v519, %v518
    %v534 = vpack.c.b16 %v521, %v520
    %v535 = vpack.c.b16 %v523, %v522
    %v536 = vpack.c.b16 %v525, %v524
    %v537 = vpack.c.b16 %v527, %v526
    %v538 = vpack.c.b16 %v529, %v528
    %v539 = vpack.c.b16 %v531, %v530
    %548 = vmatprep.subr.bf16.mxu0 0
    %549 = vmatpush1.bf16.msra.mxu0 %v532
    %550 = vmatprep.subr.bf16.mxu0 0
    %551 = vmatpush1.bf16.msra.mxu0 %v533
    %552 = vmatprep.subr.bf16.mxu0 0
    %553 = vmatpush1.bf16.msra.mxu0 %v534
    %554 = vmatprep.subr.bf16.mxu0 0
    %555 = vmatpush1.bf16.msra.mxu0 %v535
    %556 = vmatprep.subr.bf16.mxu0 0
    %557 = vmatpush1.bf16.msra.mxu0 %v536
    %558 = vmatprep.subr.bf16.mxu0 0
    %559 = vmatpush1.bf16.msra.mxu0 %v537
    %560 = vmatprep.subr.bf16.mxu0 0
    %561 = vmatpush1.bf16.msra.mxu0 %v538
    %562 = vmatprep.subr.bf16.mxu0 0
    %563 = vmatpush1.bf16.msra.mxu0 %v539
    %564 = vmatprep.subr.bf16.mxu0 0
    %565 = vmatpush1.bf16.msra.mxu0 0
    %566 = vmatprep.subr.bf16.mxu0 0
    %567 = vmatpush1.bf16.msra.mxu0 0
    %568 = vmatprep.subr.bf16.mxu0 0
    %569 = vmatpush1.bf16.msra.mxu0 0
    %570 = vmatprep.subr.bf16.mxu0 0
    %571 = vmatpush1.bf16.msra.mxu0 0
    %572 = vmatprep.subr.bf16.mxu0 0
    %573 = vmatpush1.bf16.msra.mxu0 0
    %574 = vmatprep.subr.bf16.mxu0 0
    %575 = vmatpush1.bf16.msra.mxu0 0
    %576 = vmatprep.subr.bf16.mxu0 0
    %577 = vmatpush1.bf16.msra.mxu0 0
    %578 = vmatprep.subr.bf16.mxu0 0
    %579 = vmatpush1.bf16.msra.mxu0 0
    %580 = vmatprep.mubr.bf16.mxu0 0
    %581 = vmatmul.mubr.bf16.gmra.mrb[0].mxu0 %v477
    %v582 = vpop.f32.mrb[0].mxu0
    %v583 = vadd.f32 %v499, %v582
    %v584 = vpop.f32.mrb[0].mxu0
    %v585 = vpop.f32.mrb[0].mxu0
    %v586 = vpop.f32.mrb[0].mxu0
    %587 = vdwg.mxu0
    %v588 = vmax.f32 %v583, 0.0
    %v589 = vpack.c.bf16 %v588, %v588
    %s590 = scalar_lea.vmem [#allocation2], 320
    %v591 = vld [vmem:[%s590] sm:$0xf]
    %v592 = vld [vmem:[%s590 + $0x4] sm:$0xf]
    %v593 = vld [vmem:[%s590 + $0x8] sm:$0xf]
    %v594 = vld [vmem:[%s590 + $0xc] sm:$0xf]
    %v595 = vld [vmem:[%s590 + $0x10] sm:$0xf]
    %v596 = vld [vmem:[%s590 + $0x14] sm:$0xf]
    %v597 = vld [vmem:[%s590 + $0x18] sm:$0xf]
    %v598 = vld [vmem:[%s590 + $0x1c] sm:$0xf]
    %v599 = vld [vmem:[%s590 + $0x20] sm:$0xf]
    %v600 = vld [vmem:[%s590 + $0x24] sm:$0xf]
    %v601 = vld [vmem:[%s590 + $0x28] sm:$0xf]
    %v602 = vld [vmem:[%s590 + $0x2c] sm:$0xf]
    %v603 = vld [vmem:[%s590 + $0x30] sm:$0xf]
    %v604 = vld [vmem:[%s590 + $0x34] sm:$0xf]
    %v605 = vld [vmem:[%s590 + $0x38] sm:$0xf]
    %v606 = vld [vmem:[%s590 + $0x3c] sm:$0xf]
    %v607 = vld [vmem:[%s2 + $0x5] sm:$0x1]
    %v608 = vlaneseq
    %v609 = vshrl.u32 %v608, 7
    %v610 = vsub.s32 0, %v609
    %v611 = vrot.slane %v607, %v610
    %v628 = vunpack.c.l.b16 %v591
    %v629 = vunpack.c.l.b16 %v592
    %v630 = vunpack.c.l.b16 %v593
    %v631 = vunpack.c.l.b16 %v594
    %v632 = vunpack.c.l.b16 %v595
    %v633 = vunpack.c.l.b16 %v596
    %v634 = vunpack.c.l.b16 %v597
    %v635 = vunpack.c.l.b16 %v598
    %v636 = vunpack.c.l.b16 %v599
    %v637 = vunpack.c.l.b16 %v600
    %v638 = vunpack.c.l.b16 %v601
    %v639 = vunpack.c.l.b16 %v602
    %v640 = vunpack.c.l.b16 %v603
    %v641 = vunpack.c.l.b16 %v604
    %v642 = vunpack.c.l.b16 %v605
    %v643 = vunpack.c.l.b16 %v606
    %v644 = vpack.c.b16 %v629, %v628
    %v645 = vpack.c.b16 %v631, %v630
    %v646 = vpack.c.b16 %v633, %v632
    %v647 = vpack.c.b16 %v635, %v634
    %v648 = vpack.c.b16 %v637, %v636
    %v649 = vpack.c.b16 %v639, %v638
    %v650 = vpack.c.b16 %v641, %v640
    %v651 = vpack.c.b16 %v643, %v642
    %660 = vmatprep.subr.bf16.mxu0 0
    %661 = vmatpush1.bf16.msra.mxu0 %v644
    %662 = vmatprep.subr.bf16.mxu0 0
    %663 = vmatpush1.bf16.msra.mxu0 %v645
    %664 = vmatprep.subr.bf16.mxu0 0
    %665 = vmatpush1.bf16.msra.mxu0 %v646
    %666 = vmatprep.subr.bf16.mxu0 0
    %667 = vmatpush1.bf16.msra.mxu0 %v647
    %668 = vmatprep.subr.bf16.mxu0 0
    %669 = vmatpush1.bf16.msra.mxu0 %v648
    %670 = vmatprep.subr.bf16.mxu0 0
    %671 = vmatpush1.bf16.msra.mxu0 %v649
    %672 = vmatprep.subr.bf16.mxu0 0
    %673 = vmatpush1.bf16.msra.mxu0 %v650
    %674 = vmatprep.subr.bf16.mxu0 0
    %675 = vmatpush1.bf16.msra.mxu0 %v651
    %676 = vmatprep.subr.bf16.mxu0 0
    %677 = vmatpush1.bf16.msra.mxu0 0
    %678 = vmatprep.subr.bf16.mxu0 0
    %679 = vmatpush1.bf16.msra.mxu0 0
    %680 = vmatprep.subr.bf16.mxu0 0
    %681 = vmatpush1.bf16.msra.mxu0 0
    %682 = vmatprep.subr.bf16.mxu0 0
    %683 = vmatpush1.bf16.msra.mxu0 0
    %684 = vmatprep.subr.bf16.mxu0 0
    %685 = vmatpush1.bf16.msra.mxu0 0
    %686 = vmatprep.subr.bf16.mxu0 0
    %687 = vmatpush1.bf16.msra.mxu0 0
    %688 = vmatprep.subr.bf16.mxu0 0
    %689 = vmatpush1.bf16.msra.mxu0 0
    %690 = vmatprep.subr.bf16.mxu0 0
    %691 = vmatpush1.bf16.msra.mxu0 0
    %692 = vmatprep.mubr.bf16.mxu0 0
    %693 = vmatmul.mubr.bf16.gmra.mrb[0].mxu0 %v589
    %v694 = vpop.f32.mrb[0].mxu0
    %v695 = vadd.f32 %v611, %v694
    %v696 = vpop.f32.mrb[0].mxu0
    %v697 = vpop.f32.mrb[0].mxu0
    %v698 = vpop.f32.mrb[0].mxu0
    %699 = vdwg.mxu0
    %v700 = vadd.f32 %v695, %v472
    %v701 = vmax.f32 %v700, 0.0
    %v702 = vpack.c.bf16 %v701, %v701
    %s703 = scalar_lea.vmem [#allocation2], 384
    %v704 = vld [vmem:[%s703] sm:$0xf]
    %v705 = vld [vmem:[%s703 + $0x4] sm:$0xf]
    %v706 = vld [vmem:[%s703 + $0x8] sm:$0xf]
    %v707 = vld [vmem:[%s703 + $0xc] sm:$0xf]
    %v708 = vld [vmem:[%s703 + $0x10] sm:$0xf]
    %v709 = vld [vmem:[%s703 + $0x14] sm:$0xf]
    %v710 = vld [vmem:[%s703 + $0x18] sm:$0xf]
    %v711 = vld [vmem:[%s703 + $0x1c] sm:$0xf]
    %v712 = vld [vmem:[%s703 + $0x20] sm:$0xf]
    %v713 = vld [vmem:[%s703 + $0x24] sm:$0xf]
    %v714 = vld [vmem:[%s703 + $0x28] sm:$0xf]
    %v715 = vld [vmem:[%s703 + $0x2c] sm:$0xf]
    %v716 = vld [vmem:[%s703 + $0x30] sm:$0xf]
    %v717 = vld [vmem:[%s703 + $0x34] sm:$0xf]
    %v718 = vld [vmem:[%s703 + $0x38] sm:$0xf]
    %v719 = vld [vmem:[%s703 + $0x3c] sm:$0xf]
    %v720 = vld [vmem:[%s2 + $0x6] sm:$0x1]
    %v721 = vlaneseq
    %v722 = vshrl.u32 %v721, 7
    %v723 = vsub.s32 0, %v722
    %v724 = vrot.slane %v720, %v723
    %v741 = vunpack.c.l.b16 %v704
    %v742 = vunpack.c.l.b16 %v705
    %v743 = vunpack.c.l.b16 %v706
    %v744 = vunpack.c.l.b16 %v707
    %v745 = vunpack.c.l.b16 %v708
    %v746 = vunpack.c.l.b16 %v709
    %v747 = vunpack.c.l.b16 %v710
    %v748 = vunpack.c.l.b16 %v711
    %v749 = vunpack.c.l.b16 %v712
    %v750 = vunpack.c.l.b16 %v713
    %v751 = vunpack.c.l.b16 %v714
    %v752 = vunpack.c.l.b16 %v715
    %v753 = vunpack.c.l.b16 %v716
    %v754 = vunpack.c.l.b16 %v717
    %v755 = vunpack.c.l.b16 %v718
    %v756 = vunpack.c.l.b16 %v719
    %v757 = vpack.c.b16 %v742, %v741
    %v758 = vpack.c.b16 %v744, %v743
    %v759 = vpack.c.b16 %v746, %v745
    %v760 = vpack.c.b16 %v748, %v747
    %v761 = vpack.c.b16 %v750, %v749
    %v762 = vpack.c.b16 %v752, %v751
    %v763 = vpack.c.b16 %v754, %v753
    %v764 = vpack.c.b16 %v756, %v755
    %773 = vmatprep.subr.bf16.mxu0 0
    %774 = vmatpush1.bf16.msra.mxu0 %v757
    %775 = vmatprep.subr.bf16.mxu0 0
    %776 = vmatpush1.bf16.msra.mxu0 %v758
    %777 = vmatprep.subr.bf16.mxu0 0
    %778 = vmatpush1.bf16.msra.mxu0 %v759
    %779 = vmatprep.subr.bf16.mxu0 0
    %780 = vmatpush1.bf16.msra.mxu0 %v760
    %781 = vmatprep.subr.bf16.mxu0 0
    %782 = vmatpush1.bf16.msra.mxu0 %v761
    %783 = vmatprep.subr.bf16.mxu0 0
    %784 = vmatpush1.bf16.msra.mxu0 %v762
    %785 = vmatprep.subr.bf16.mxu0 0
    %786 = vmatpush1.bf16.msra.mxu0 %v763
    %787 = vmatprep.subr.bf16.mxu0 0
    %788 = vmatpush1.bf16.msra.mxu0 %v764
    %789 = vmatprep.subr.bf16.mxu0 0
    %790 = vmatpush1.bf16.msra.mxu0 0
    %791 = vmatprep.subr.bf16.mxu0 0
    %792 = vmatpush1.bf16.msra.mxu0 0
    %793 = vmatprep.subr.bf16.mxu0 0
    %794 = vmatpush1.bf16.msra.mxu0 0
    %795 = vmatprep.subr.bf16.mxu0 0
    %796 = vmatpush1.bf16.msra.mxu0 0
    %797 = vmatprep.subr.bf16.mxu0 0
    %798 = vmatpush1.bf16.msra.mxu0 0
    %799 = vmatprep.subr.bf16.mxu0 0
    %800 = vmatpush1.bf16.msra.mxu0 0
    %801 = vmatprep.subr.bf16.mxu0 0
    %802 = vmatpush1.bf16.msra.mxu0 0
    %803 = vmatprep.subr.bf16.mxu0 0
    %804 = vmatpush1.bf16.msra.mxu0 0
    %805 = vmatprep.mubr.bf16.mxu0 0
    %806 = vmatmul.mubr.bf16.gmra.mrb[0].mxu0 %v702
    %v807 = vpop.f32.mrb[0].mxu0
    %v808 = vadd.f32 %v724, %v807
    %v809 = vpop.f32.mrb[0].mxu0
    %v810 = vpop.f32.mrb[0].mxu0
    %v811 = vpop.f32.mrb[0].mxu0
    %812 = vdwg.mxu0
    %813 = vst [vmem:[#allocation5] sm:$0xff] %v808
    // Predicated region
    $region18: #{simple_mlp_residual.1} parent=1 // pred_check
      _
    $region19: #{simple_mlp_residual.1} parent=1 // pred_check_branch
      %815 = sbr.rel (0) target = $region21
    $region20: #{simple_mlp_residual.1} parent=1 // pred_region
      %s817 = ssub.s32 128, 128
      %818 = vsyncadd [#allocation4], %s817
      %s820 = sshll.u32 [#allocation5], 4
      %s821 = int_to_ptr.vmem [resolvable:$true] %s820
      %823 = dma.vmem_to_hbm [thread:$0]  %s821, 128, %s3, [#allocation4]
    $region21: #{simple_mlp_residual.1} parent=1 // pred_fallthru
      _
    // Predicated region
    $region22: #{simple_mlp_residual.1} parent=1 // pred_check
      _
    $region23: #{simple_mlp_residual.1} parent=1 // pred_check_branch
      %825 = sbr.rel (0) target = $region25
    $region24: #{simple_mlp_residual.1} parent=1 // pred_region
      %826 = dma.done [#allocation4], 128
    $region25: #{simple_mlp_residual.1} parent=1 // pred_fallthru
      _
    %827 = vsyncpa [#allocation3], 1
    %828 = vsyncpa [#allocation4], 1

</llo_original>
